<compile_context>
chip_gen: v5e
topology: v5e:2x2
jax: 0.10.0
libtpu: 0.0.40
codegen_flags: <defaults>
</compile_context>

<pallas_src>
import jax
import jax.numpy as jnp
import numpy as np
from jax.experimental import pallas as pl
from jax.experimental.pallas import tpu as pltpu

RANK = 4


def edge_lora_kernel(sem_ref,                 # scalar prefetch (SMEM), (B_pad,) int32
                     x_ref, grad_ref,         # (BT, TN, D) blocks
                     weff_ref,                # (4, D, RANK) full branch stack, VMEM-resident
                     wg_ref,                  # (D, RANK)  = wg @ wfu
                     wb_ref,                  # (RANK, D)  proj_back weight
                     cst_ref,                 # (1, D)     all biases folded through proj_back
                     out_ref):                # (BT, TN, D)
    bt = x_ref.shape[0]
    b0 = pl.program_id(0) * bt
    for i in range(bt):                       # BT is small (2-8); static unroll
        s = sem_ref[b0 + i]                   # branch slot for this batch row (0 = no branch)
        x_i = x_ref[i]                        # (TN, D), native dtype straight into the MXU
        g_i = grad_ref[i]

        # rank = x @ W_eff[sem] + grad @ (wg @ wfu)       (bias constant folded away)
        rank = (jnp.dot(x_i, weff_ref[s], preferred_element_type=jnp.float32)
                + jnp.dot(g_i, wg_ref[...], preferred_element_type=jnp.float32))

        # out = rank @ wb + const_out + grad   (residual added in grad's native dtype)
        recon = jnp.dot(rank, wb_ref[...], preferred_element_type=jnp.float32)
        out_ref[i] = (recon + cst_ref[...]).astype(out_ref.dtype) + g_i


def edge_lora_forward(x, grad, sem_idx, folded, *, tile_n=512, batch_tile=2):
    """Fused EdgeLora forward over a (B, N, D) batch."""
    B, N, D = x.shape

    TN = min(tile_n, N)
    BT = min(batch_tile, B)
    nb = pl.cdiv(B, BT)
    grid = (nb, pl.cdiv(N, TN))

    # Clamp sem into {0..3} (slot 0 == zero branch) and pad to the grid's batch
    # extent so in-kernel SMEM reads on a partial last block stay in bounds.
    sem_safe = jnp.where((sem_idx >= 1) & (sem_idx <= 3), sem_idx, 0).astype(jnp.int32)
    pad = nb * BT - B
    if pad:
        sem_safe = jnp.concatenate([sem_safe, jnp.zeros((pad,), jnp.int32)])

    # Weights in x.dtype (bf16 in production) -> native MXU path; const stays f32
    # since it is added to the f32 accumulator.
    w_eff = folded["w_eff"].astype(x.dtype)          # (4, D, RANK)
    wg_eff = folded["wg_eff"].astype(x.dtype)        # (D, RANK)
    wb = folded["wb"].astype(x.dtype)                # (RANK, D)
    const_out = folded["const_out"].astype(jnp.float32)  # (1, D)

    io_spec = pl.BlockSpec((BT, TN, D), lambda b, n, sem: (b, n, 0))
    in_specs = [
        io_spec,                                                   # x
        io_spec,                                                   # grad
        pl.BlockSpec((4, D, RANK), lambda b, n, sem: (0, 0, 0)),   # W_eff stack (resident)
        pl.BlockSpec((D, RANK), lambda b, n, sem: (0, 0)),         # wg_eff
        pl.BlockSpec((RANK, D), lambda b, n, sem: (0, 0)),         # wb
        pl.BlockSpec((1, D), lambda b, n, sem: (0, 0)),            # folded bias constant
    ]

    grid_spec = pltpu.PrefetchScalarGridSpec(
        num_scalar_prefetch=1,
        grid=grid,
        in_specs=in_specs,
        out_specs=io_spec,
    )

    return pl.pallas_call(
        edge_lora_kernel,
        grid_spec=grid_spec,
        out_shape=jax.ShapeDtypeStruct((B, N, D), x.dtype),
        compiler_params=pltpu.CompilerParams(
            dimension_semantics=("parallel", "parallel"),
            vmem_limit_bytes=48 * 1024 * 1024),
    )(sem_safe, x, grad, w_eff, wg_eff, wb, const_out)


def module_parallel_forward(x_parallel, sem_idx, folded, **kwargs):
    """ModuleParallel.forward fused into ONE pallas_call.

    Semantically identical to [module(x) for x in x_parallel]: the list
    elements are concatenated along the batch axis (sem_idx replicated per
    element), run through a single kernel, and split back on the host.
    """
    xs = jnp.concatenate([p[0] for p in x_parallel], axis=0)
    gs = jnp.concatenate([p[1] for p in x_parallel], axis=0)
    sems = jnp.concatenate([sem_idx] * len(x_parallel), axis=0)
    fused = edge_lora_forward(xs, gs, sems, folded, **kwargs)
    outs, off = [], 0
    for p in x_parallel:
        b = p[0].shape[0]
        outs.append(fused[off:off + b])
        off += b
    return outs


def init_params(key, embed_dim, rank=RANK):
    """Deterministic init matching the nn.Linear shapes of EdgeLora.

    Weights are stored pre-transposed as (in_features, out_features) so
    y = x @ W + b.  Biases are (1, out_features).
    """
    ks = jax.random.split(key, 14)

    def linear(kw, kb, fan_in, fan_out):
        bound = 1.0 / np.sqrt(fan_in)
        w = jax.random.uniform(kw, (fan_in, fan_out), jnp.float32, -bound, bound)
        b = jax.random.uniform(kb, (1, fan_out), jnp.float32, -bound, bound)
        return w, b

    wd, bd = linear(ks[0], ks[1], embed_dim, rank)        # proj_d
    wt, bt = linear(ks[2], ks[3], embed_dim, rank)        # proj_t
    we, be = linear(ks[4], ks[5], embed_dim, rank)        # proj_e
    wg, bg = linear(ks[6], ks[7], embed_dim, rank)        # proj_grad
    wfuse, bf = linear(ks[8], ks[9], 3 * rank, rank)      # proj_fuse (12 -> 4)
    wfu, bfu = linear(ks[10], ks[11], rank, rank)         # fuse
    wb, bb = linear(ks[12], ks[13], rank, embed_dim)      # proj_back

    return dict(wd=wd, bd=bd, wt=wt, bt=bt, we=we, be=be, wg=wg, bg=bg,
                wfuse=wfuse, bf=bf, wfu=wfu, bfu=bfu, wb=wb, bb=bb)


def fold_params(params, rank=RANK):
    """Fold the 7 Linear layers into 4 kernel operands (exact algebra).

    rank_act = x @ W_eff[sem] + grad @ (wg @ wfu) + const_rank
    out      = rank_act @ wb + bb + grad
             = x @ W_eff[sem] @ wb + grad @ wg_eff @ wb + const_out + grad
    """
    wfd = params["wfuse"][0 * rank:1 * rank]
    wft = params["wfuse"][1 * rank:2 * rank]
    wfe = params["wfuse"][2 * rank:3 * rank]
    D = params["wd"].shape[0]

    w_eff = jnp.stack([
        jnp.zeros((D, rank), params["wd"].dtype),    # sem == 0 (or invalid) -> no branch
        params["wd"] @ wfd,                          # sem == 1
        params["wt"] @ wft,                          # sem == 2
        params["we"] @ wfe,                          # sem == 3
    ], axis=0)                                       # (4, D, RANK)

    wg_eff = params["wg"] @ params["wfu"]            # (D, RANK)

    const_rank = (params["bd"] @ wfd + params["bt"] @ wft + params["be"] @ wfe
                  + params["bf"] + params["bg"] @ params["wfu"] + params["bfu"])  # (1, RANK)
    const_out = const_rank @ params["wb"] + params["bb"]                          # (1, D)

    return dict(w_eff=w_eff, wg_eff=wg_eff, wb=params["wb"], const_out=const_out)


def edge_lora_reference(x, grad, sem_idx, params):
    """Pure-JAX reference mirroring the PyTorch forward (unfolded)."""
    mask = lambda v: (sem_idx == v)[:, None, None].astype(x.dtype)
    d = x * mask(1)
    t = x * mask(2)
    e = x * mask(3)
    rank_d = d @ params["wd"] + params["bd"]
    rank_t = t @ params["wt"] + params["bt"]
    rank_e = e @ params["we"] + params["be"]
    rank_g = grad @ params["wg"] + params["bg"]
    cat = jnp.concatenate([rank_d, rank_t, rank_e], axis=2)
    fused = cat @ params["wfuse"] + params["bf"]
    guide = rank_g @ params["wfu"] + params["bfu"]
    rank = fused + guide
    recon = rank @ params["wb"] + params["bb"]
    return recon + grad


if __name__ == "__main__":
    B, N, D = 4, 8, 32
    key = jax.random.PRNGKey(0)
    k_x1, k_g1, k_x2, k_g2, k_p = jax.random.split(key, 5)

    params = init_params(k_p, D)
    folded = fold_params(params)

    sem_idx = jnp.array([1, 2, 3, 0], dtype=jnp.int32)   # one of each branch + none

    x1 = jax.random.normal(k_x1, (B, N, D), jnp.float32)
    g1 = jax.random.normal(k_g1, (B, N, D), jnp.float32)
    x2 = jax.random.normal(k_x2, (B, N, D), jnp.float32)
    g2 = jax.random.normal(k_g2, (B, N, D), jnp.float32)

    # ModuleParallel semantics, fused into a single pallas_call over the list.
    x_parallel = [(x1, g1), (x2, g2)]
    outs = jax.block_until_ready(
        module_parallel_forward(x_parallel, sem_idx, folded,
                                tile_n=512, batch_tile=2))

    for (xx, gg), out in zip(x_parallel, outs):
        ref = edge_lora_reference(xx, gg, sem_idx, params)
        np.testing.assert_allclose(np.asarray(out), np.asarray(ref),
                                   rtol=1e-4, atol=1e-5)

    # TODO(synk): if downstream tolerates bf16 outputs, pass a bf16 out dtype to
    # halve the writeback HBM stream (~17% less total traffic).
    print("KERNEL_OK")
</pallas_src>

<mosaic_0001>
module attributes {stable_mosaic.version = 11 : i64} {
  func.func @edge_lora_kernel(%arg0: i32, %arg1: i32, %arg2: memref<8xi32, #tpu.memory_space<smem>>, %arg3: memref<2x8x32xf32, #tpu.memory_space<vmem>>, %arg4: memref<2x8x32xf32, #tpu.memory_space<vmem>>, %arg5: memref<4x32x4xf32, #tpu.memory_space<vmem>>, %arg6: memref<32x4xf32, #tpu.memory_space<vmem>>, %arg7: memref<4x32xf32, #tpu.memory_space<vmem>>, %arg8: memref<1x32xf32, #tpu.memory_space<vmem>>, %arg9: memref<2x8x32xf32, #tpu.memory_space<vmem>>) attributes {dimension_semantics = [#tpu.dimension_semantics<parallel>, #tpu.dimension_semantics<parallel>], iteration_bounds = array<i64: 4, 1>, scalar_prefetch = 1 : i64, scratch_operands = 0 : i64, tpu.core_type = #tpu.core_type<tc>, window_params = [{transform_indices = @transform_0, window_bounds = array<i64: 2, 8, 32>}, {transform_indices = @transform_1, window_bounds = array<i64: 2, 8, 32>}, {pipeline_mode = #tpu.pipeline_mode<synchronous>, transform_indices = @transform_2, window_bounds = array<i64: 4, 32, 4>}, {pipeline_mode = #tpu.pipeline_mode<synchronous>, transform_indices = @transform_3, window_bounds = array<i64: 32, 4>}, {pipeline_mode = #tpu.pipeline_mode<synchronous>, transform_indices = @transform_4, window_bounds = array<i64: 4, 32>}, {pipeline_mode = #tpu.pipeline_mode<synchronous>, transform_indices = @transform_5, window_bounds = array<i64: 1, 32>}, {transform_indices = @transform_6, window_bounds = array<i64: 2, 8, 32>}]} {
    %c2_i32 = arith.constant 2 : i32
    %0 = arith.muli %arg0, %c2_i32 : i32
    %c0_i32 = arith.constant 0 : i32
    %1 = arith.addi %0, %c0_i32 : i32
    %2 = arith.index_cast %1 : i32 to index
    %3 = memref.load %arg2[%2] : memref<8xi32, #tpu.memory_space<smem>>
    %c0 = arith.constant 0 : index
    %c0_0 = arith.constant 0 : index
    %c0_1 = arith.constant 0 : index
    %4 = vector.load %arg3[%c0, %c0_0, %c0_1] : memref<2x8x32xf32, #tpu.memory_space<vmem>>, vector<1x8x32xf32>
    %5 = vector.shape_cast %4 : vector<1x8x32xf32> to vector<8x32xf32>
    %c0_2 = arith.constant 0 : index
    %c0_3 = arith.constant 0 : index
    %c0_4 = arith.constant 0 : index
    %6 = vector.load %arg4[%c0_2, %c0_3, %c0_4] : memref<2x8x32xf32, #tpu.memory_space<vmem>>, vector<1x8x32xf32>
    %7 = vector.shape_cast %6 : vector<1x8x32xf32> to vector<8x32xf32>
    %8 = arith.index_cast %3 : i32 to index
    %c0_5 = arith.constant 0 : index
    %c0_6 = arith.constant 0 : index
    %9 = vector.load %arg5[%8, %c0_5, %c0_6] : memref<4x32x4xf32, #tpu.memory_space<vmem>>, vector<1x32x4xf32>
    %10 = vector.shape_cast %9 : vector<1x32x4xf32> to vector<32x4xf32>
    %cst = arith.constant dense<0.000000e+00> : vector<8x4xf32>
    %11 = tpu.matmul %5, %10, %cst {dimension_numbers = #tpu.dot_dimension_numbers<[1], [0], [0], [1], [0, 0, 1, 1], [], []>} : vector<8x32xf32>, vector<32x4xf32>, vector<8x4xf32> -> vector<8x4xf32>
    %c0_7 = arith.constant 0 : index
    %c0_8 = arith.constant 0 : index
    %12 = vector.load %arg6[%c0_7, %c0_8] : memref<32x4xf32, #tpu.memory_space<vmem>>, vector<32x4xf32>
    %cst_9 = arith.constant dense<0.000000e+00> : vector<8x4xf32>
    %13 = tpu.matmul %7, %12, %cst_9 {dimension_numbers = #tpu.dot_dimension_numbers<[1], [0], [0], [1], [0, 0, 1, 1], [], []>} : vector<8x32xf32>, vector<32x4xf32>, vector<8x4xf32> -> vector<8x4xf32>
    %14 = arith.addf %11, %13 : vector<8x4xf32>
    %c0_10 = arith.constant 0 : index
    %c0_11 = arith.constant 0 : index
    %15 = vector.load %arg7[%c0_10, %c0_11] : memref<4x32xf32, #tpu.memory_space<vmem>>, vector<4x32xf32>
    %cst_12 = arith.constant dense<0.000000e+00> : vector<8x32xf32>
    %16 = tpu.matmul %14, %15, %cst_12 {dimension_numbers = #tpu.dot_dimension_numbers<[1], [0], [0], [1], [0, 0, 1, 1], [], []>} : vector<8x4xf32>, vector<4x32xf32>, vector<8x32xf32> -> vector<8x32xf32>
    %c0_13 = arith.constant 0 : index
    %c0_14 = arith.constant 0 : index
    %17 = vector.load %arg8[%c0_13, %c0_14] : memref<1x32xf32, #tpu.memory_space<vmem>>, vector<1x32xf32>
    %18 = vector.broadcast %17 : vector<1x32xf32> to vector<8x32xf32>
    %19 = arith.addf %16, %18 : vector<8x32xf32>
    %20 = arith.addf %19, %7 : vector<8x32xf32>
    %c0_15 = arith.constant 0 : index
    %c0_16 = arith.constant 0 : index
    %c0_17 = arith.constant 0 : index
    %21 = vector.load %arg9[%c0_15, %c0_16, %c0_17] : memref<2x8x32xf32, #tpu.memory_space<vmem>>, vector<1x8x32xf32>
    %22 = vector.shape_cast %21 : vector<1x8x32xf32> to vector<8x32xf32>
    %23 = vector.shape_cast %20 : vector<8x32xf32> to vector<1x8x32xf32>
    tpu.vector_store %arg9[%c0_15, %c0_16, %c0_17], %23 {strides = array<i32>} : memref<2x8x32xf32, #tpu.memory_space<vmem>>, vector<1x8x32xf32>,
    %c1_i32 = arith.constant 1 : i32
    %24 = arith.addi %0, %c1_i32 : i32
    %25 = arith.index_cast %24 : i32 to index
    %26 = memref.load %arg2[%25] : memref<8xi32, #tpu.memory_space<smem>>
    %c1 = arith.constant 1 : index
    %c0_18 = arith.constant 0 : index
    %c0_19 = arith.constant 0 : index
    %27 = vector.load %arg3[%c1, %c0_18, %c0_19] : memref<2x8x32xf32, #tpu.memory_space<vmem>>, vector<1x8x32xf32>
    %28 = vector.shape_cast %27 : vector<1x8x32xf32> to vector<8x32xf32>
    %c1_20 = arith.constant 1 : index
    %c0_21 = arith.constant 0 : index
    %c0_22 = arith.constant 0 : index
    %29 = vector.load %arg4[%c1_20, %c0_21, %c0_22] : memref<2x8x32xf32, #tpu.memory_space<vmem>>, vector<1x8x32xf32>
    %30 = vector.shape_cast %29 : vector<1x8x32xf32> to vector<8x32xf32>
    %31 = arith.index_cast %26 : i32 to index
    %c0_23 = arith.constant 0 : index
    %c0_24 = arith.constant 0 : index
    %32 = vector.load %arg5[%31, %c0_23, %c0_24] : memref<4x32x4xf32, #tpu.memory_space<vmem>>, vector<1x32x4xf32>
    %33 = vector.shape_cast %32 : vector<1x32x4xf32> to vector<32x4xf32>
    %cst_25 = arith.constant dense<0.000000e+00> : vector<8x4xf32>
    %34 = tpu.matmul %28, %33, %cst_25 {dimension_numbers = #tpu.dot_dimension_numbers<[1], [0], [0], [1], [0, 0, 1, 1], [], []>} : vector<8x32xf32>, vector<32x4xf32>, vector<8x4xf32> -> vector<8x4xf32>
    %c0_26 = arith.constant 0 : index
    %c0_27 = arith.constant 0 : index
    %35 = vector.load %arg6[%c0_26, %c0_27] : memref<32x4xf32, #tpu.memory_space<vmem>>, vector<32x4xf32>
    %cst_28 = arith.constant dense<0.000000e+00> : vector<8x4xf32>
    %36 = tpu.matmul %30, %35, %cst_28 {dimension_numbers = #tpu.dot_dimension_numbers<[1], [0], [0], [1], [0, 0, 1, 1], [], []>} : vector<8x32xf32>, vector<32x4xf32>, vector<8x4xf32> -> vector<8x4xf32>
    %37 = arith.addf %34, %36 : vector<8x4xf32>
    %c0_29 = arith.constant 0 : index
    %c0_30 = arith.constant 0 : index
    %38 = vector.load %arg7[%c0_29, %c0_30] : memref<4x32xf32, #tpu.memory_space<vmem>>, vector<4x32xf32>
    %cst_31 = arith.constant dense<0.000000e+00> : vector<8x32xf32>
    %39 = tpu.matmul %37, %38, %cst_31 {dimension_numbers = #tpu.dot_dimension_numbers<[1], [0], [0], [1], [0, 0, 1, 1], [], []>} : vector<8x4xf32>, vector<4x32xf32>, vector<8x32xf32> -> vector<8x32xf32>
    %c0_32 = arith.constant 0 : index
    %c0_33 = arith.constant 0 : index
    %40 = vector.load %arg8[%c0_32, %c0_33] : memref<1x32xf32, #tpu.memory_space<vmem>>, vector<1x32xf32>
    %41 = vector.broadcast %40 : vector<1x32xf32> to vector<8x32xf32>
    %42 = arith.addf %39, %41 : vector<8x32xf32>
    %43 = arith.addf %42, %30 : vector<8x32xf32>
    %c1_34 = arith.constant 1 : index
    %c0_35 = arith.constant 0 : index
    %c0_36 = arith.constant 0 : index
    %44 = vector.load %arg9[%c1_34, %c0_35, %c0_36] : memref<2x8x32xf32, #tpu.memory_space<vmem>>, vector<1x8x32xf32>
    %45 = vector.shape_cast %44 : vector<1x8x32xf32> to vector<8x32xf32>
    %46 = vector.shape_cast %43 : vector<8x32xf32> to vector<1x8x32xf32>
    tpu.vector_store %arg9[%c1_34, %c0_35, %c0_36], %46 {strides = array<i32>} : memref<2x8x32xf32, #tpu.memory_space<vmem>>, vector<1x8x32xf32>,
    return
  }
  func.func @transform_0(%arg0: i32, %arg1: i32, %arg2: memref<8xi32, #tpu.memory_space<smem>>) -> (i32, i32, i32) {
    %c0_i32 = arith.constant 0 : i32
    %c0_i32_0 = arith.constant 0 : i32
    return %arg0, %arg1, %c0_i32 : i32, i32, i32
  }
  func.func @transform_1(%arg0: i32, %arg1: i32, %arg2: memref<8xi32, #tpu.memory_space<smem>>) -> (i32, i32, i32) {
    %c0_i32 = arith.constant 0 : i32
    %c0_i32_0 = arith.constant 0 : i32
    return %arg0, %arg1, %c0_i32 : i32, i32, i32
  }
  func.func @transform_2(%arg0: i32, %arg1: i32, %arg2: memref<8xi32, #tpu.memory_space<smem>>) -> (i32, i32, i32) {
    %c0_i32 = arith.constant 0 : i32
    %c0_i32_0 = arith.constant 0 : i32
    %c0_i32_1 = arith.constant 0 : i32
    %c0_i32_2 = arith.constant 0 : i32
    return %c0_i32, %c0_i32_0, %c0_i32_1 : i32, i32, i32
  }
  func.func @transform_3(%arg0: i32, %arg1: i32, %arg2: memref<8xi32, #tpu.memory_space<smem>>) -> (i32, i32) {
    %c0_i32 = arith.constant 0 : i32
    %c0_i32_0 = arith.constant 0 : i32
    %c0_i32_1 = arith.constant 0 : i32
    return %c0_i32, %c0_i32_0 : i32, i32
  }
  func.func @transform_4(%arg0: i32, %arg1: i32, %arg2: memref<8xi32, #tpu.memory_space<smem>>) -> (i32, i32) {
    %c0_i32 = arith.constant 0 : i32
    %c0_i32_0 = arith.constant 0 : i32
    %c0_i32_1 = arith.constant 0 : i32
    return %c0_i32, %c0_i32_0 : i32, i32
  }
  func.func @transform_5(%arg0: i32, %arg1: i32, %arg2: memref<8xi32, #tpu.memory_space<smem>>) -> (i32, i32) {
    %c0_i32 = arith.constant 0 : i32
    %c0_i32_0 = arith.constant 0 : i32
    %c0_i32_1 = arith.constant 0 : i32
    return %c0_i32, %c0_i32_0 : i32, i32
  }
  func.func @transform_6(%arg0: i32, %arg1: i32, %arg2: memref<8xi32, #tpu.memory_space<smem>>) -> (i32, i32, i32) {
    %c0_i32 = arith.constant 0 : i32
    %c0_i32_0 = arith.constant 0 : i32
    return %arg0, %arg1, %c0_i32 : i32, i32, i32
  }
}

</mosaic_0001>

<llo_original>
// kernel: tpu_custom_call.1
$region0: #{tpu_custom_call.1}
  #allocation0 [shape = 'u32[]', space=smem, size = 0x4, offset = 0x4, fixed_abs, tag = 'smem constant byte address 0x4 - core index']
  #allocation1 [shape = 'u32[72,128]{1,0:T(1,128)}', space=vmem, size = 0x9000, scoped, tag = 'internal scratch']
  #allocation2 [shape = 's32[1]{0}', space=sflag, size = 0x4, scoped, tag = 'scoped memory for tpu_custom_call.1']
  #allocation3 [shape = 'u8[512]{0}', space=smem, size = 0x200, scoped, tag = 'prefetched SMEM operand 0']
  %s0 = inlined_call_operand.vmem [shape: s32[8], index: 0, kind: input, shape index: {}]
  %s1 = inlined_call_operand.vmem [shape: f32[8,8,32], index: 1, kind: input, shape index: {}]
  %s2 = inlined_call_operand.vmem [shape: f32[8,8,32], index: 2, kind: input, shape index: {}]
  %s3 = inlined_call_operand.vmem [shape: f32[4,32,4], index: 3, kind: input, shape index: {}]
  %s4 = inlined_call_operand.vmem [shape: f32[32,4], index: 4, kind: input, shape index: {}]
  %s5 = inlined_call_operand.vmem [shape: f32[4,32], index: 5, kind: input, shape index: {}]
  %s6 = inlined_call_operand.vmem [shape: f32[1,32], index: 6, kind: input, shape index: {}]
  %s7 = inlined_call_operand.hbm [shape: f32[8,8,32], index: 7, kind: output, shape index: {}]
  %s8 = sld [smem:[#allocation0]]
  $region57: #{tpu_custom_call.1} parent=0
    _
  %s10 = ssub.s32 1, %s8
  %s11 = scalar_select 0, %s10, %s8
  %s13 = sshll.u32 %s0, 4
  %s14 = int_to_ptr.vmem [resolvable:$true] %s13
  %16 = dma.vmem_to_smem %s14, 16, [#allocation3], [#allocation2]
  %18 = dma.done [#allocation2], 16
  %19 = sfence
  $region1: #{tpu_custom_call.1} parent=0
    #allocation4 [shape = 'u8[16384]{0}', space=vmem, size = 0x4000, scoped, tag = 'output window, operand 0']
    #allocation5 [shape = 's32[2]{0}', space=sflag, size = 0x8, scoped, tag = 'scoped memory for tpu_custom_call.1']
    %20 = vsyncpa [#allocation5], 0
    %s21 = scalar_lea.sflag [#allocation5], 1
    %22 = vsyncpa %s21, 0
    loop: start=0, step=1, limit=6
    $region2: #{tpu_custom_call.1} parent=1 // loop_pre_header
      _
    $region3: #{tpu_custom_call.1} parent=1 // loop_header
      %s24 = sphi 0, %s28
      %p25 = scmp.ge.s32.totalorder %s24, 6
      %s31 = sphi 0, %s43
      %s32 = sphi 0, %s39
      %s33 = sphi 0, %s31
      %s34 = sphi 0, %s32
      %s35 = sphi 0, %s33
      %s36 = sphi 0, %s34
      %s48 = sphi 0, %s50
      %s51 = sphi 0, %s48
      %s52 = sphi 0, %s51
      %s68 = sphi 0, %s52
      %s76 = sphi 0, %s78
      %s79 = sphi 0, %s76
      %s80 = sphi 0, %s79
      %s96 = sphi 0, %s80
      %s100 = sphi 0, %s100
      %s102 = sphi 0, %s100
      %s103 = sphi 0, %s102
      %s117 = sphi 0, %s103
      %s121 = sphi 0, %s121
      %s123 = sphi 0, %s121
      %s124 = sphi 0, %s123
      %s138 = sphi 0, %s124
      %s142 = sphi 0, %s142
      %s144 = sphi 0, %s142
      %s145 = sphi 0, %s144
      %s159 = sphi 0, %s145
      %s163 = sphi 0, %s163
      %s165 = sphi 0, %s163
      %s166 = sphi 0, %s165
      %s180 = sphi 0, %s166
      %s188 = sphi 0, %s190
      %s191 = sphi 0, %s188
      %s192 = sphi 0, %s191
      %s208 = sphi 0, %s192
    $region4: #{tpu_custom_call.1} parent=1 // loop_header_branch
      %27 = sbr.rel (%p25) target = $region8
    $region5: #{tpu_custom_call.1} parent=1 // loop_body
      %s29 = ssub.s32 %s24, 1
      %s30 = ssub.s32 %s24, 2
      %s37 = sadd.s32 1, %s32
      %p38 = scmp.ge.s32.totalorder %s37, 1
      %s39 = scalar_select %p38, 0, %s37
      %s40 = sadd.s32 1, %s31
      %s41 = scalar_select %p38, %s40, %s31
      %p42 = scmp.ge.s32.totalorder %s41, 4
      %s43 = scalar_select %p42, 0, %s41
      %s44 = ssub.s32 %s31, %s43
      %s45 = ssub.s32 %s32, %s39
      %s46 = sor.u32 %s44, %s45
      %p47 = scmp.eq.s32.totalorder %s46, 0
      %s49 = sadd.s32 %s48, 1
      %s50 = scalar_select %p47, %s48, %s49
      %p53 = pneg %p47
      %p54 = scmp.eq.s32.totalorder %s24, 3
      %p55 = por %p53, %p54
      %p56 = scmp.ne.s32.totalorder %s48, %s51
      %p57 = scmp.eq.s32.totalorder %s24, 0
      %p58 = por %p56, %p57
      %p59 = scmp.ne.s32.totalorder %s48, %s51
      %p60 = scmp.eq.s32.totalorder %s29, 3
      %p61 = por %p59, %p60
      %p62 = scmp.ne.s32.totalorder %s51, %s52
      %p63 = scmp.eq.s32.totalorder %s29, 0
      %p64 = por %p62, %p63
      %p65 = scmp.ne.s32.totalorder %s51, %s52
      %p66 = scmp.eq.s32.totalorder %s30, 3
      %p67 = por %p65, %p66
      %p69 = scmp.ne.s32.totalorder %s52, %s68
      %p70 = scmp.eq.s32.totalorder %s30, 0
      %p71 = por %p69, %p70
      %s72 = ssub.s32 %s31, %s43
      %s73 = ssub.s32 %s32, %s39
      %s74 = sor.u32 %s72, %s73
      %p75 = scmp.eq.s32.totalorder %s74, 0
      %s77 = sadd.s32 %s76, 1
      %s78 = scalar_select %p75, %s76, %s77
      %p81 = pneg %p75
      %p82 = scmp.eq.s32.totalorder %s24, 3
      %p83 = por %p81, %p82
      %p84 = scmp.ne.s32.totalorder %s76, %s79
      %p85 = scmp.eq.s32.totalorder %s24, 0
      %p86 = por %p84, %p85
      %p87 = scmp.ne.s32.totalorder %s76, %s79
      %p88 = scmp.eq.s32.totalorder %s29, 3
      %p89 = por %p87, %p88
      %p90 = scmp.ne.s32.totalorder %s79, %s80
      %p91 = scmp.eq.s32.totalorder %s29, 0
      %p92 = por %p90, %p91
      %p93 = scmp.ne.s32.totalorder %s79, %s80
      %p94 = scmp.eq.s32.totalorder %s30, 3
      %p95 = por %p93, %p94
      %p97 = scmp.ne.s32.totalorder %s80, %s96
      %p98 = scmp.eq.s32.totalorder %s30, 0
      %p99 = por %p97, %p98
      %s101 = sadd.s32 %s100, 1
      %p104 = scmp.eq.s32.totalorder %s24, 3
      %p105 = scmp.ne.s32.totalorder %s100, %s102
      %p106 = scmp.eq.s32.totalorder %s24, 0
      %p107 = por %p105, %p106
      %p108 = scmp.ne.s32.totalorder %s100, %s102
      %p109 = scmp.eq.s32.totalorder %s29, 3
      %p110 = por %p108, %p109
      %p111 = scmp.ne.s32.totalorder %s102, %s103
      %p112 = scmp.eq.s32.totalorder %s29, 0
      %p113 = por %p111, %p112
      %p114 = scmp.ne.s32.totalorder %s102, %s103
      %p115 = scmp.eq.s32.totalorder %s30, 3
      %p116 = por %p114, %p115
      %p118 = scmp.ne.s32.totalorder %s103, %s117
      %p119 = scmp.eq.s32.totalorder %s30, 0
      %p120 = por %p118, %p119
      %s122 = sadd.s32 %s121, 1
      %p125 = scmp.eq.s32.totalorder %s24, 3
      %p126 = scmp.ne.s32.totalorder %s121, %s123
      %p127 = scmp.eq.s32.totalorder %s24, 0
      %p128 = por %p126, %p127
      %p129 = scmp.ne.s32.totalorder %s121, %s123
      %p130 = scmp.eq.s32.totalorder %s29, 3
      %p131 = por %p129, %p130
      %p132 = scmp.ne.s32.totalorder %s123, %s124
      %p133 = scmp.eq.s32.totalorder %s29, 0
      %p134 = por %p132, %p133
      %p135 = scmp.ne.s32.totalorder %s123, %s124
      %p136 = scmp.eq.s32.totalorder %s30, 3
      %p137 = por %p135, %p136
      %p139 = scmp.ne.s32.totalorder %s124, %s138
      %p140 = scmp.eq.s32.totalorder %s30, 0
      %p141 = por %p139, %p140
      %s143 = sadd.s32 %s142, 1
      %p146 = scmp.eq.s32.totalorder %s24, 3
      %p147 = scmp.ne.s32.totalorder %s142, %s144
      %p148 = scmp.eq.s32.totalorder %s24, 0
      %p149 = por %p147, %p148
      %p150 = scmp.ne.s32.totalorder %s142, %s144
      %p151 = scmp.eq.s32.totalorder %s29, 3
      %p152 = por %p150, %p151
      %p153 = scmp.ne.s32.totalorder %s144, %s145
      %p154 = scmp.eq.s32.totalorder %s29, 0
      %p155 = por %p153, %p154
      %p156 = scmp.ne.s32.totalorder %s144, %s145
      %p157 = scmp.eq.s32.totalorder %s30, 3
      %p158 = por %p156, %p157
      %p160 = scmp.ne.s32.totalorder %s145, %s159
      %p161 = scmp.eq.s32.totalorder %s30, 0
      %p162 = por %p160, %p161
      %s164 = sadd.s32 %s163, 1
      %p167 = scmp.eq.s32.totalorder %s24, 3
      %p168 = scmp.ne.s32.totalorder %s163, %s165
      %p169 = scmp.eq.s32.totalorder %s24, 0
      %p170 = por %p168, %p169
      %p171 = scmp.ne.s32.totalorder %s163, %s165
      %p172 = scmp.eq.s32.totalorder %s29, 3
      %p173 = por %p171, %p172
      %p174 = scmp.ne.s32.totalorder %s165, %s166
      %p175 = scmp.eq.s32.totalorder %s29, 0
      %p176 = por %p174, %p175
      %p177 = scmp.ne.s32.totalorder %s165, %s166
      %p178 = scmp.eq.s32.totalorder %s30, 3
      %p179 = por %p177, %p178
      %p181 = scmp.ne.s32.totalorder %s166, %s180
      %p182 = scmp.eq.s32.totalorder %s30, 0
      %p183 = por %p181, %p182
      %s184 = ssub.s32 %s31, %s43
      %s185 = ssub.s32 %s32, %s39
      %s186 = sor.u32 %s184, %s185
      %p187 = scmp.eq.s32.totalorder %s186, 0
      %s189 = sadd.s32 %s188, 1
      %s190 = scalar_select %p187, %s188, %s189
      %p193 = pneg %p187
      %p194 = scmp.eq.s32.totalorder %s24, 3
      %p195 = por %p193, %p194
      %p196 = scmp.ne.s32.totalorder %s188, %s191
      %p197 = scmp.eq.s32.totalorder %s24, 0
      %p198 = por %p196, %p197
      %p199 = scmp.ne.s32.totalorder %s188, %s191
      %p200 = scmp.eq.s32.totalorder %s29, 3
      %p201 = por %p199, %p200
      %p202 = scmp.ne.s32.totalorder %s191, %s192
      %p203 = scmp.eq.s32.totalorder %s29, 0
      %p204 = por %p202, %p203
      %p205 = scmp.ne.s32.totalorder %s191, %s192
      %p206 = scmp.eq.s32.totalorder %s30, 3
      %p207 = por %p205, %p206
      %p209 = scmp.ne.s32.totalorder %s192, %s208
      %p210 = scmp.eq.s32.totalorder %s30, 0
      %p211 = por %p209, %p210
      %p212 = scmp.le.s32.totalorder 1, %s24
      %p213 = scmp.lt.s32.totalorder %s24, 5
      %p214 = pnand %p212, %p213
      %p215 = pneg %p214
      // Predicated region
      $region9: #{tpu_custom_call.1} parent=5 // pred_check
        _
      $region10: #{tpu_custom_call.1} parent=5 // pred_check_branch
        %217 = sbr.rel (%p214) target = $region12
      $region11: #{tpu_custom_call.1} parent=5 // pred_region
        %s218 = ssub.s32 %s24, 1
        // Predicated region
        $region13: #{tpu_custom_call.1} parent=11 // pred_check
          %p219 = pneg %p113
        $region14: #{tpu_custom_call.1} parent=11 // pred_check_branch
          %221 = sbr.rel (%p219) target = $region16
        $region15: #{tpu_custom_call.1} parent=11 // pred_region
          _
        $region16: #{tpu_custom_call.1} parent=11 // pred_fallthru
          _
        // Predicated region
        $region17: #{tpu_custom_call.1} parent=11 // pred_check
          %p222 = pneg %p134
        $region18: #{tpu_custom_call.1} parent=11 // pred_check_branch
          %224 = sbr.rel (%p222) target = $region20
        $region19: #{tpu_custom_call.1} parent=11 // pred_region
          _
        $region20: #{tpu_custom_call.1} parent=11 // pred_fallthru
          _
        // Predicated region
        $region21: #{tpu_custom_call.1} parent=11 // pred_check
          %p225 = pneg %p155
        $region22: #{tpu_custom_call.1} parent=11 // pred_check_branch
          %227 = sbr.rel (%p225) target = $region24
        $region23: #{tpu_custom_call.1} parent=11 // pred_region
          _
        $region24: #{tpu_custom_call.1} parent=11 // pred_fallthru
          _
        // Predicated region
        $region25: #{tpu_custom_call.1} parent=11 // pred_check
          %p228 = pneg %p176
        $region26: #{tpu_custom_call.1} parent=11 // pred_check_branch
          %230 = sbr.rel (%p228) target = $region28
        $region27: #{tpu_custom_call.1} parent=11 // pred_region
          _
        $region28: #{tpu_custom_call.1} parent=11 // pred_fallthru
          _
      $region12: #{tpu_custom_call.1} parent=5 // pred_fallthru
        _
      %p231 = scmp.lt.s32.totalorder %s24, 4
      // Predicated region
      $region29: #{tpu_custom_call.1} parent=5 // pred_check
        %p232 = pneg %p231
      $region30: #{tpu_custom_call.1} parent=5 // pred_check_branch
        %234 = sbr.rel (%p232) target = $region32
      $region31: #{tpu_custom_call.1} parent=5 // pred_region
        // Predicated region
        $region33: #{tpu_custom_call.1} parent=31 // pred_check
          %p235 = pneg %p58
        $region34: #{tpu_custom_call.1} parent=31 // pred_check_branch
          %237 = sbr.rel (%p235) target = $region36
        $region35: #{tpu_custom_call.1} parent=31 // pred_region
          %s238 = smul.u32 2, %s31
          %p239 = scmp.lt.s32.totalorder %s238, 7
          %s240 = scalar_select %p239, %s238, 7
          %p241 = scmp.lt.s32.totalorder %s32, 0
          %s242 = scalar_select %p241, %s32, 0
          %s243 = sadd.s32 %s242, %s240
          %s244 = smul.addr %s243, 8
          %s245 = scalar_lea.vmem %s1, %s244
          %s246 = smul.u32 2, %s31
        $region36: #{tpu_custom_call.1} parent=31 // pred_fallthru
          _
        // Predicated region
        $region37: #{tpu_custom_call.1} parent=31 // pred_check
          %p247 = pneg %p86
        $region38: #{tpu_custom_call.1} parent=31 // pred_check_branch
          %249 = sbr.rel (%p247) target = $region40
        $region39: #{tpu_custom_call.1} parent=31 // pred_region
          %s250 = smul.u32 2, %s31
          %p251 = scmp.lt.s32.totalorder %s250, 7
          %s252 = scalar_select %p251, %s250, 7
          %p253 = scmp.lt.s32.totalorder %s32, 0
          %s254 = scalar_select %p253, %s32, 0
          %s255 = sadd.s32 %s254, %s252
          %s256 = smul.addr %s255, 8
          %s257 = scalar_lea.vmem %s2, %s256
          %s258 = smul.u32 2, %s31
        $region40: #{tpu_custom_call.1} parent=31 // pred_fallthru
          _
      $region32: #{tpu_custom_call.1} parent=5 // pred_fallthru
        _
      %p259 = scmp.le.s32.totalorder 1, %s24
      %p260 = scmp.lt.s32.totalorder %s24, 5
      %p261 = pnand %p259, %p260
      %p262 = pneg %p261
      // Predicated region
      $region41: #{tpu_custom_call.1} parent=5 // pred_check
        _
      $region42: #{tpu_custom_call.1} parent=5 // pred_check_branch
        %264 = sbr.rel (%p261) target = $region44
      $region43: #{tpu_custom_call.1} parent=5 // pred_region
        %s265 = ssub.s32 %s24, 1
        %s266 = smul.u32 2, %s33
        %p267 = scmp.lt.s32.totalorder %s266, 7
        %s268 = scalar_select %p267, %s266, 7
        %p269 = scmp.lt.s32.totalorder %s34, 0
        %s270 = scalar_select %p269, %s34, 0
        %s271 = sadd.s32 %s270, %s268
        %s272 = smul.addr %s271, 8
        %s273 = scalar_lea.vmem %s1, %s272
        %p274 = pneg %p64
        %p275 = pneg %p61
        %s276 = smul.u32 2, %s33
        %p277 = scmp.lt.s32.totalorder %s276, 7
        %s278 = scalar_select %p277, %s276, 7
        %p279 = scmp.lt.s32.totalorder %s34, 0
        %s280 = scalar_select %p279, %s34, 0
        %s281 = sadd.s32 %s280, %s278
        %s282 = smul.addr %s281, 8
        %s283 = scalar_lea.vmem %s2, %s282
        %p284 = pneg %p92
        %p285 = pneg %p89
        %p286 = pneg %p113
        %p287 = pneg %p110
        %p288 = pneg %p134
        %p289 = pneg %p131
        %p290 = pneg %p155
        %p291 = pneg %p152
        %p292 = pneg %p176
        %p293 = pneg %p173
        %p294 = pneg %p204
        %p295 = pneg %p201
        %s296 = sand.u32 %s191, 1
        %s297 = scalar_lea.sflag [#allocation5], %s296
        %s298 = sand.u32 %s191, 1
        %s299 = smul.addr %s298, 16
        %s300 = scalar_lea.vmem [#allocation4], %s299
        %s301 = smul.u32 2, %s33
        %p302 = scmp.lt.s32.totalorder %s301, 7
        %s303 = scalar_select %p302, %s301, 7
        %p304 = scmp.lt.s32.totalorder %s34, 0
        %s305 = scalar_select %p304, %s34, 0
        %s306 = sadd.s32 %s305, %s303
        %s307 = smul.addr %s306, 8
        %s308 = scalar_lea.vmem %s1, %s307
        %s309 = smul.u32 2, %s33
        %s310 = smul.u32 2, %s33
        %p311 = scmp.lt.s32.totalorder %s310, 7
        %s312 = scalar_select %p311, %s310, 7
        %p313 = scmp.lt.s32.totalorder %s34, 0
        %s314 = scalar_select %p313, %s34, 0
        %s315 = sadd.s32 %s314, %s312
        %s316 = smul.addr %s315, 8
        %s317 = scalar_lea.vmem %s2, %s316
        %s318 = smul.u32 2, %s33
        %s319 = smul.u32 2, %s33
        %s320 = smul.u32 %s33, 2
        %s321 = sld [smem:[#allocation3 + %s320]]
        %v322 = vld [vmem:[%s308] sm:$0xff]
        %v323 = vld [vmem:[%s317] sm:$0xff]
        %s324 = smul.u32 %s321, 32
        %s325 = scalar_lea.vmem %s3, %s324
        %v326 = vld [vmem:[%s325] sm:$0xff]
        %v327 = vld [vmem:[%s325 + $0x8] sm:$0xff]
        %v328 = vld [vmem:[%s325 + $0x10] sm:$0xff]
        %v329 = vld [vmem:[%s325 + $0x18] sm:$0xff]
        %v330 = vld [vmem:[%s4] sm:$0xff]
        %v331 = vld [vmem:[%s4 + $0x8] sm:$0xff]
        %v332 = vld [vmem:[%s4 + $0x10] sm:$0xff]
        %v333 = vld [vmem:[%s4 + $0x18] sm:$0xff]
        %vm334 = vcmask 261120
        %v336 = vsel %vm334, %v323, 0
        %338 = vmatpush.msra.mxu0 0.0
        %339 = vmatpush.msra.mxu0 0.0
        %340 = vmatpush.msra.mxu0 0.0
        %341 = vmatpush.msra.mxu0 0.0
        %342 = vmatpush.msra.mxu0 0.0
        %343 = vmatpush.msra.mxu0 0.0
        %344 = vmatpush.msra.mxu0 0.0
        %345 = vmatpush.msra.mxu0 0.0
        %346 = vmatpush.msra.mxu0 0.0
        %347 = vmatpush.msra.mxu0 0.0
        %348 = vmatpush.msra.mxu0 0.0
        %349 = vmatpush.msra.mxu0 0.0
        %350 = vmatpush.msra.mxu0 %v333
        %351 = vmatpush.msra.mxu0 %v332
        %352 = vmatpush.msra.mxu0 %v331
        %353 = vmatpush.msra.mxu0 %v330
        %354 = vmatmul.f32.gmra.mxu0 %v336
        %v355 = vpop.f32.mrf.mxu0
        %v356 = vadd.f32 0.0, %v355
        %357 = vdwg.mxu0
        %v359 = vsel %vm334, %v322, 0
        %361 = vmatpush.msra.mxu0 0.0
        %362 = vmatpush.msra.mxu0 0.0
        %363 = vmatpush.msra.mxu0 0.0
        %364 = vmatpush.msra.mxu0 0.0
        %365 = vmatpush.msra.mxu0 0.0
        %366 = vmatpush.msra.mxu0 0.0
        %367 = vmatpush.msra.mxu0 0.0
        %368 = vmatpush.msra.mxu0 0.0
        %369 = vmatpush.msra.mxu0 0.0
        %370 = vmatpush.msra.mxu0 0.0
        %371 = vmatpush.msra.mxu0 0.0
        %372 = vmatpush.msra.mxu0 0.0
        %373 = vmatpush.msra.mxu0 %v329
        %374 = vmatpush.msra.mxu0 %v328
        %375 = vmatpush.msra.mxu0 %v327
        %376 = vmatpush.msra.mxu0 %v326
        %377 = vmatmul.f32.gmra.mxu0 %v359
        %v378 = vpop.f32.mrf.mxu0
        %v379 = vadd.f32 %v356, %v378
        %380 = vdwg.mxu0
        %v381 = vld [vmem:[%s5] sm:$0xf]
        %v382 = vld [vmem:[%s6] sm:$0x1]
        %v384 = vperm.slane %v382, 0
        %vm386 = vcmask 31744
        %v388 = vsel %vm386, %v379, 0
        %vm390 = vcmask 1043456
        %v392 = vsel %vm390, %v381, 0
        %394 = vmatpush.msra.mxu0 0.0
        %395 = vmatpush.msra.mxu0 0.0
        %396 = vmatpush.msra.mxu0 0.0
        %397 = vmatpush.msra.mxu0 0.0
        %398 = vmatpush.msra.mxu0 0.0
        %399 = vmatpush.msra.mxu0 0.0
        %400 = vmatpush.msra.mxu0 0.0
        %401 = vmatpush.msra.mxu0 0.0
        %402 = vmatpush.msra.mxu0 0.0
        %403 = vmatpush.msra.mxu0 0.0
        %404 = vmatpush.msra.mxu0 0.0
        %405 = vmatpush.msra.mxu0 0.0
        %406 = vmatpush.msra.mxu0 0.0
        %407 = vmatpush.msra.mxu0 0.0
        %408 = vmatpush.msra.mxu0 0.0
        %409 = vmatpush.msra.mxu0 %v392
        %410 = vmatmul.f32.gmra.mxu0 %v388
        %v411 = vpop.f32.mrf.mxu0
        %v412 = vadd.f32 %v384, %v411
        %413 = vdwg.mxu0
        %v414 = vadd.f32 %v412, %v323
        %415 = vst.msk [vmem:[%s300] sm:$0xff] %vm334, %v414
        %s416 = sadd.s32 %s320, 1
        %s417 = sld [smem:[#allocation3 + %s416]]
        %s418 = scalar_lea.vmem %s308, 8
        %v419 = vld [vmem:[%s418] sm:$0xff]
        %s420 = scalar_lea.vmem %s317, 8
        %v421 = vld [vmem:[%s420] sm:$0xff]
        %s422 = smul.u32 %s417, 32
        %s423 = scalar_lea.vmem %s3, %s422
        %v424 = vld [vmem:[%s423] sm:$0xff]
        %v425 = vld [vmem:[%s423 + $0x8] sm:$0xff]
        %v426 = vld [vmem:[%s423 + $0x10] sm:$0xff]
        %v427 = vld [vmem:[%s423 + $0x18] sm:$0xff]
        %v428 = vld [vmem:[%s4] sm:$0xff]
        %v429 = vld [vmem:[%s4 + $0x8] sm:$0xff]
        %v430 = vld [vmem:[%s4 + $0x10] sm:$0xff]
        %v431 = vld [vmem:[%s4 + $0x18] sm:$0xff]
        %v433 = vsel %vm334, %v421, 0
        %435 = vmatpush.msra.mxu0 0.0
        %436 = vmatpush.msra.mxu0 0.0
        %437 = vmatpush.msra.mxu0 0.0
        %438 = vmatpush.msra.mxu0 0.0
        %439 = vmatpush.msra.mxu0 0.0
        %440 = vmatpush.msra.mxu0 0.0
        %441 = vmatpush.msra.mxu0 0.0
        %442 = vmatpush.msra.mxu0 0.0
        %443 = vmatpush.msra.mxu0 0.0
        %444 = vmatpush.msra.mxu0 0.0
        %445 = vmatpush.msra.mxu0 0.0
        %446 = vmatpush.msra.mxu0 0.0
        %447 = vmatpush.msra.mxu0 %v431
        %448 = vmatpush.msra.mxu0 %v430
        %449 = vmatpush.msra.mxu0 %v429
        %450 = vmatpush.msra.mxu0 %v428
        %451 = vmatmul.f32.gmra.mxu0 %v433
        %v452 = vpop.f32.mrf.mxu0
        %v453 = vadd.f32 0.0, %v452
        %454 = vdwg.mxu0
        %v456 = vsel %vm334, %v419, 0
        %458 = vmatpush.msra.mxu0 0.0
        %459 = vmatpush.msra.mxu0 0.0
        %460 = vmatpush.msra.mxu0 0.0
        %461 = vmatpush.msra.mxu0 0.0
        %462 = vmatpush.msra.mxu0 0.0
        %463 = vmatpush.msra.mxu0 0.0
        %464 = vmatpush.msra.mxu0 0.0
        %465 = vmatpush.msra.mxu0 0.0
        %466 = vmatpush.msra.mxu0 0.0
        %467 = vmatpush.msra.mxu0 0.0
        %468 = vmatpush.msra.mxu0 0.0
        %469 = vmatpush.msra.mxu0 0.0
        %470 = vmatpush.msra.mxu0 %v427
        %471 = vmatpush.msra.mxu0 %v426
        %472 = vmatpush.msra.mxu0 %v425
        %473 = vmatpush.msra.mxu0 %v424
        %474 = vmatmul.f32.gmra.mxu0 %v456
        %v475 = vpop.f32.mrf.mxu0
        %v476 = vadd.f32 %v453, %v475
        %477 = vdwg.mxu0
        %v478 = vld [vmem:[%s5] sm:$0xf]
        %v479 = vld [vmem:[%s6] sm:$0x1]
        %v481 = vperm.slane %v479, 0
        %v484 = vsel %vm386, %v476, 0
        %v487 = vsel %vm390, %v478, 0
        %489 = vmatpush.msra.mxu0 0.0
        %490 = vmatpush.msra.mxu0 0.0
        %491 = vmatpush.msra.mxu0 0.0
        %492 = vmatpush.msra.mxu0 0.0
        %493 = vmatpush.msra.mxu0 0.0
        %494 = vmatpush.msra.mxu0 0.0
        %495 = vmatpush.msra.mxu0 0.0
        %496 = vmatpush.msra.mxu0 0.0
        %497 = vmatpush.msra.mxu0 0.0
        %498 = vmatpush.msra.mxu0 0.0
        %499 = vmatpush.msra.mxu0 0.0
        %500 = vmatpush.msra.mxu0 0.0
        %501 = vmatpush.msra.mxu0 0.0
        %502 = vmatpush.msra.mxu0 0.0
        %503 = vmatpush.msra.mxu0 0.0
        %504 = vmatpush.msra.mxu0 %v487
        %505 = vmatmul.f32.gmra.mxu0 %v484
        %v506 = vpop.f32.mrf.mxu0
        %v507 = vadd.f32 %v481, %v506
        %508 = vdwg.mxu0
        %v509 = vadd.f32 %v507, %v421
        %s510 = scalar_lea.vmem %s300, 8 [#allocation4]
        %511 = vst.msk [vmem:[%s510] sm:$0xff] %vm334, %v509
        %s512 = sand.u32 %s191, 1
        %s513 = scalar_lea.sflag [#allocation5], %s512
        %s514 = sand.u32 %s191, 1
        %s515 = smul.addr %s514, 16
        %s516 = scalar_lea.vmem [#allocation4], %s515
        // Predicated region
        $region45: #{tpu_custom_call.1} parent=43 // pred_check
          %p517 = pneg %p201
        $region46: #{tpu_custom_call.1} parent=43 // pred_check_branch
          %519 = sbr.rel (%p517) target = $region48
        $region47: #{tpu_custom_call.1} parent=43 // pred_region
          %s520 = smul.u32 2, %s33
          %522 = vsyncadd %s513, 0
          %s523 = sadd.s32 %s34, %s520
          %s524 = smul.addr %s523, 8
          %s525 = scalar_lea.hbm %s7, %s524
          %s526 = sshll.u32 %s516, 4
          %s527 = int_to_ptr.vmem [resolvable:$true] %s526
          %s528 = sshll.u32 %s525, 4
          %s529 = int_to_ptr.hbm [resolvable:$true] %s528
          %534 = dma.vmem_to_hbm [thread:$0]  %s527, 256, %s529, %s513, 128, 128, 8
        $region48: #{tpu_custom_call.1} parent=43 // pred_fallthru
          _
      $region44: #{tpu_custom_call.1} parent=5 // pred_fallthru
        _
      %p535 = scmp.le.s32.totalorder 2, %s24
      // Predicated region
      $region49: #{tpu_custom_call.1} parent=5 // pred_check
        %p536 = pneg %p535
      $region50: #{tpu_custom_call.1} parent=5 // pred_check_branch
        %538 = sbr.rel (%p536) target = $region52
      $region51: #{tpu_custom_call.1} parent=5 // pred_region
        %s539 = ssub.s32 %s24, 2
        // Predicated region
        $region53: #{tpu_custom_call.1} parent=51 // pred_check
          %p540 = pneg %p207
        $region54: #{tpu_custom_call.1} parent=51 // pred_check_branch
          %542 = sbr.rel (%p540) target = $region56
        $region55: #{tpu_custom_call.1} parent=51 // pred_region
          %s543 = sand.u32 %s192, 1
          %s544 = scalar_lea.sflag [#allocation5], %s543
          %s545 = sand.u32 %s192, 1
          %s546 = smul.addr %s545, 16
          %s547 = scalar_lea.vmem [#allocation4], %s546
          %549 = dma.done %s544, 256
        $region56: #{tpu_custom_call.1} parent=51 // pred_fallthru
          _
      $region52: #{tpu_custom_call.1} parent=5 // pred_fallthru
        _
    $region6: #{tpu_custom_call.1} parent=1 // loop_footer
      %s28 = sadd.s32 1, %s24
    $region7: #{tpu_custom_call.1} parent=1 // loop_footer_branch
      %23 = sbr.rel target = $region3
    $region8: #{tpu_custom_call.1} parent=1 // loop_exit
      _
    %550 = vsyncpa [#allocation5], 1
    %s551 = scalar_lea.sflag [#allocation5], 1
    %552 = vsyncpa %s551, 1

</llo_original>
